<compile_context>
chip_gen: v7x
topology: tpu7x:2x2x1
jax: 0.10.0
libtpu: 0.0.40
codegen_flags: <defaults>
</compile_context>

<pallas_src>
import functools
import math

import jax
import jax.numpy as jnp
from jax.experimental import pallas as pl
from jax.experimental.pallas import tpu as pltpu


def _layernorm_kernel(x_ref, g_ref, b_ref, o_ref, *, eps):
    # One (tm, D) row tile per grid step; normalize every row over D.
    x = x_ref[...].astype(jnp.float32)                 # (tm, D)
    mean = jnp.mean(x, axis=-1, keepdims=True)         # (tm, 1)  XLU reduce
    xc = x - mean
    var = jnp.mean(xc * xc, axis=-1, keepdims=True)    # (tm, 1)  XLU reduce
    inv = jax.lax.rsqrt(var + eps)                     # EUP rsqrt, f32
    g = g_ref[...].astype(jnp.float32)                 # (1, D), resident
    b = b_ref[...].astype(jnp.float32)                 # (1, D), resident
    y = xc * inv * g + b
    o_ref[...] = y.astype(o_ref.dtype)


def _pick_tm(M, D):
    """Pick the row-tile size.

    Largest 128-aligned tile whose double-buffered in/out tiles plus f32
    working set (~6 f32 copies of (tm, D)) fit a 24 MiB budget; prefer a tile
    that divides M (no masked partial store) and keeps >= 2 grid steps.
    """
    budget = 24 * 1024 * 1024
    max_tm = max(8, budget // (6 * D * 4))
    candidates = [c for c in (1024, 512, 256, 128) if c <= max_tm]
    if not candidates:
        # Very large D: fall back to a small 8-aligned tile (or the full M).
        return min(M, max(8, (max_tm // 8) * 8))
    if M <= candidates[-1]:
        # Tiny input: one full block (block dim == array dim is always legal).
        return M
    # Prefer exact divisors of M with at least 2 grid steps (megacore).
    for c in candidates:
        if M % c == 0 and M // c >= 2:
            return c
    # Otherwise the largest tile that still yields >= 2 steps.
    for c in candidates:
        if pl.cdiv(M, c) >= 2:
            return c
    return candidates[-1]


def layer_norm_forward(x, weight=None, bias=None, *, eps=1e-5, tm=None):
    """Pallas LayerNorm over the last dimension.

    x:      (..., D)
    weight: (D,) or None (treated as ones)   -- nn.LayerNorm gamma
    bias:   (D,) or None (treated as zeros)  -- nn.LayerNorm beta
    """
    *lead, D = x.shape
    M = int(math.prod(lead)) if lead else 1
    x2d = x.reshape(M, D)

    if weight is None:
        weight = jnp.ones((D,), dtype=x.dtype)
    if bias is None:
        bias = jnp.zeros((D,), dtype=x.dtype)
    gamma2d = weight.reshape(1, D)
    beta2d = bias.reshape(1, D)

    if tm is None:
        tm = _pick_tm(M, D)
    grid = (pl.cdiv(M, tm),)  # partial last block handled by Pallas

    kernel = functools.partial(_layernorm_kernel, eps=float(eps))

    itemsize = jnp.dtype(x.dtype).itemsize
    cost = pl.CostEstimate(
        flops=8 * M * D,
        transcendentals=M,
        bytes_accessed=2 * M * D * itemsize + 2 * D * itemsize,
    )

    out2d = pl.pallas_call(
        kernel,
        out_shape=jax.ShapeDtypeStruct((M, D), x.dtype),
        grid_spec=pltpu.PrefetchScalarGridSpec(
            num_scalar_prefetch=0,
            grid=grid,
            in_specs=[
                # x row-tile: (tm, D); D kept whole (it is the reduction dim).
                pl.BlockSpec((tm, D), lambda i: (i, 0)),
                # gamma / beta: same tiny block every step -> stays resident.
                pl.BlockSpec((1, D), lambda i: (0, 0)),
                pl.BlockSpec((1, D), lambda i: (0, 0)),
            ],
            out_specs=pl.BlockSpec((tm, D), lambda i: (i, 0)),
        ),
        compiler_params=pltpu.CompilerParams(
            dimension_semantics=("parallel",),
            vmem_limit_bytes=48 * 1024 * 1024,
        ),
        cost_estimate=cost,
    )(x2d, gamma2d, beta2d)

    return out2d.reshape(*lead, D)


def _reference(x, gamma, beta, eps):
    mean = x.mean(-1, keepdims=True)
    var = ((x - mean) ** 2).mean(-1, keepdims=True)
    return (x - mean) / jnp.sqrt(var + eps) * gamma + beta


if __name__ == "__main__":
    eps = 1e-5
    key = jax.random.PRNGKey(0)
    k_x, k_g, k_b, k_x2 = jax.random.split(key, 4)

    # Case 1: small shapes consistent with the module (LayerNorm over hidden D).
    batch, seq, D = 2, 256, 256            # M = 512 rows, D lane-dense (mult of 128)
    x = jax.random.normal(k_x, (batch, seq, D), dtype=jnp.float32)
    # PyTorch default init is gamma=1, beta=0; perturb so the affine path runs.
    gamma = 1.0 + 0.1 * jax.random.normal(k_g, (D,), dtype=jnp.float32)
    beta = 0.1 * jax.random.normal(k_b, (D,), dtype=jnp.float32)

    y = layer_norm_forward(x, gamma, beta, eps=eps)
    jax.block_until_ready(y)
    y_ref = _reference(x, gamma, beta, eps)
    assert y.shape == (batch, seq, D)
    assert jnp.allclose(y, y_ref, atol=1e-4, rtol=1e-5)

    # Case 2: row count that does not divide the tile (exercises the masked
    # partial last block path), same gamma/beta.
    x2 = jax.random.normal(k_x2, (3, 100, D), dtype=jnp.float32)   # M = 300
    y2 = layer_norm_forward(x2, gamma, beta, eps=eps)
    jax.block_until_ready(y2)
    y2_ref = _reference(x2, gamma, beta, eps)
    assert y2.shape == (3, 100, D)
    assert jnp.allclose(y2, y2_ref, atol=1e-4, rtol=1e-5)

    print("KERNEL_OK")
</pallas_src>

<mosaic_0001>
module attributes {stable_mosaic.version = 11 : i64} {
  func.func @_layernorm_kernel(%arg0: i32, %arg1: memref<256x256xf32, #tpu.memory_space<vmem>>, %arg2: memref<1x256xf32, #tpu.memory_space<vmem>>, %arg3: memref<1x256xf32, #tpu.memory_space<vmem>>, %arg4: memref<256x256xf32, #tpu.memory_space<vmem>>) attributes {dimension_semantics = [#tpu.dimension_semantics<parallel>], iteration_bounds = array<i64: 2>, scalar_prefetch = 0 : i64, scratch_operands = 0 : i64, tpu.core_type = #tpu.core_type<tc>, window_params = [{transform_indices = @transform_0, window_bounds = array<i64: 256, 256>}, {pipeline_mode = #tpu.pipeline_mode<synchronous>, transform_indices = @transform_1, window_bounds = array<i64: 1, 256>}, {pipeline_mode = #tpu.pipeline_mode<synchronous>, transform_indices = @transform_2, window_bounds = array<i64: 1, 256>}, {transform_indices = @transform_3, window_bounds = array<i64: 256, 256>}]} {
    %c0 = arith.constant 0 : index
    %c0_0 = arith.constant 0 : index
    %0 = vector.load %arg1[%c0, %c0_0] : memref<256x256xf32, #tpu.memory_space<vmem>>, vector<256x256xf32>
    %cst = arith.constant dense<0.000000e+00> : vector<256xf32>
    %1 = vector.multi_reduction <add>, %0, %cst [1] : vector<256x256xf32> to vector<256xf32>
    %2 = vector.shape_cast %1 : vector<256xf32> to vector<256x1xf32>
    %cst_1 = arith.constant 2.560000e+02 : f32
    %3 = vector.broadcast %cst_1 : f32 to vector<256x1xf32>
    %4 = arith.divf %2, %3 : vector<256x1xf32>
    %5 = vector.broadcast %4 : vector<256x1xf32> to vector<256x256xf32>
    %6 = arith.subf %0, %5 : vector<256x256xf32>
    %7 = arith.mulf %6, %6 : vector<256x256xf32>
    %cst_2 = arith.constant dense<0.000000e+00> : vector<256xf32>
    %8 = vector.multi_reduction <add>, %7, %cst_2 [1] : vector<256x256xf32> to vector<256xf32>
    %9 = vector.shape_cast %8 : vector<256xf32> to vector<256x1xf32>
    %cst_3 = arith.constant 2.560000e+02 : f32
    %10 = vector.broadcast %cst_3 : f32 to vector<256x1xf32>
    %11 = arith.divf %9, %10 : vector<256x1xf32>
    %cst_4 = arith.constant 9.99999974E-6 : f32
    %12 = vector.broadcast %cst_4 : f32 to vector<256x1xf32>
    %13 = arith.addf %11, %12 : vector<256x1xf32>
    %14 = math.rsqrt %13 : vector<256x1xf32>
    %c0_5 = arith.constant 0 : index
    %c0_6 = arith.constant 0 : index
    %15 = vector.load %arg2[%c0_5, %c0_6] : memref<1x256xf32, #tpu.memory_space<vmem>>, vector<1x256xf32>
    %c0_7 = arith.constant 0 : index
    %c0_8 = arith.constant 0 : index
    %16 = vector.load %arg3[%c0_7, %c0_8] : memref<1x256xf32, #tpu.memory_space<vmem>>, vector<1x256xf32>
    %17 = vector.broadcast %14 : vector<256x1xf32> to vector<256x256xf32>
    %18 = arith.mulf %6, %17 : vector<256x256xf32>
    %19 = vector.broadcast %15 : vector<1x256xf32> to vector<256x256xf32>
    %20 = arith.mulf %18, %19 : vector<256x256xf32>
    %21 = vector.broadcast %16 : vector<1x256xf32> to vector<256x256xf32>
    %22 = arith.addf %20, %21 : vector<256x256xf32>
    %c0_9 = arith.constant 0 : index
    %c0_10 = arith.constant 0 : index
    %23 = vector.load %arg4[%c0_9, %c0_10] : memref<256x256xf32, #tpu.memory_space<vmem>>, vector<256x256xf32>
    tpu.vector_store %arg4[%c0_9, %c0_10], %22 {strides = array<i32>} : memref<256x256xf32, #tpu.memory_space<vmem>>, vector<256x256xf32>,
    return
  }
  func.func @transform_0(%arg0: i32) -> (i32, i32) {
    %c0_i32 = arith.constant 0 : i32
    %c0_i32_0 = arith.constant 0 : i32
    return %arg0, %c0_i32 : i32, i32
  }
  func.func @transform_1(%arg0: i32) -> (i32, i32) {
    %c0_i32 = arith.constant 0 : i32
    %c0_i32_0 = arith.constant 0 : i32
    %c0_i32_1 = arith.constant 0 : i32
    return %c0_i32, %c0_i32_0 : i32, i32
  }
  func.func @transform_2(%arg0: i32) -> (i32, i32) {
    %c0_i32 = arith.constant 0 : i32
    %c0_i32_0 = arith.constant 0 : i32
    %c0_i32_1 = arith.constant 0 : i32
    return %c0_i32, %c0_i32_0 : i32, i32
  }
  func.func @transform_3(%arg0: i32) -> (i32, i32) {
    %c0_i32 = arith.constant 0 : i32
    %c0_i32_0 = arith.constant 0 : i32
    return %arg0, %c0_i32 : i32, i32
  }
}

</mosaic_0001>

<llo_original>
// kernel: tpu_custom_call.1
$region0: #{tpu_custom_call.1}
  #allocation0 [shape = 'u32[]', space=smem, size = 0x4, offset = 0x4, fixed_abs, tag = 'smem constant byte address 0x4 - core index']
  #allocation1 [shape = 'u32[144,128]{1,0:T(1,128)}', space=vmem, size = 0x12000, scoped, tag = 'internal scratch']
  %s0 = inlined_call_operand.hbm [shape: f32[512,256], index: 0, kind: input, shape index: {}]
  %s1 = inlined_call_operand.vmem [shape: f32[1,256], index: 1, kind: input, shape index: {}]
  %s2 = inlined_call_operand.vmem [shape: f32[1,256], index: 2, kind: input, shape index: {}]
  %s3 = inlined_call_operand.hbm [shape: f32[512,256], index: 3, kind: output, shape index: {}]
  %s4 = sld [smem:[#allocation0]]
  $region49: #{tpu_custom_call.1} parent=0
    _
  %s6 = ssub.s32 1, %s4
  %s7 = scalar_select 0, %s6, %s4
  $region1: #{tpu_custom_call.1} parent=0
    #allocation2 [shape = 'u8[524288]{0}', space=vmem, size = 0x80000, scoped, tag = 'input window, operand 0']
    #allocation3 [shape = 's32[2]{0}', space=sflag, size = 0x8, scoped, tag = 'scoped memory for tpu_custom_call.1']
    #allocation4 [shape = 's32[2]{0}', space=sflag, size = 0x8, scoped, tag = 'scoped memory for tpu_custom_call.1']
    #allocation5 [shape = 'u8[524288]{0}', space=vmem, size = 0x80000, scoped, tag = 'output window, operand 0']
    %8 = vsyncpa [#allocation3], 0
    %s9 = scalar_lea.sflag [#allocation3], 1
    %10 = vsyncpa %s9, 0
    %11 = vsyncpa [#allocation4], 0
    %s12 = scalar_lea.sflag [#allocation4], 1
    %13 = vsyncpa %s12, 0
    loop: start=0, step=1, limit=4
    $region2: #{tpu_custom_call.1} parent=1 // loop_pre_header
      _
    $region3: #{tpu_custom_call.1} parent=1 // loop_header
      %s15 = sphi 0, %s19
      %p16 = scmp.ge.s32.totalorder %s15, 4
      %s25 = sphi 0, %s27
      %s28 = sphi 0, %s25
      %s29 = sphi 0, %s28
      %s45 = sphi 0, %s29
      %s49 = sphi 0, %s49
      %s51 = sphi 0, %s49
      %s52 = sphi 0, %s51
      %s66 = sphi 0, %s52
      %s70 = sphi 0, %s70
      %s72 = sphi 0, %s70
      %s73 = sphi 0, %s72
      %s87 = sphi 0, %s73
      %s93 = sphi 0, %s95
      %s96 = sphi 0, %s93
      %s97 = sphi 0, %s96
      %s113 = sphi 0, %s97
    $region4: #{tpu_custom_call.1} parent=1 // loop_header_branch
      %18 = sbr.rel (%p16) target = $region8
    $region5: #{tpu_custom_call.1} parent=1 // loop_body
      %s20 = ssub.s32 %s15, 1
      %s21 = ssub.s32 %s15, 2
      %s22 = sadd.s32 %s15, 1
      %s23 = ssub.s32 %s15, %s22
      %p24 = scmp.eq.s32.totalorder %s23, 0
      %s26 = sadd.s32 %s25, 1
      %s27 = scalar_select %p24, %s25, %s26
      %p30 = pneg %p24
      %p31 = scmp.eq.s32.totalorder %s15, 1
      %p32 = por %p30, %p31
      %p33 = scmp.ne.s32.totalorder %s25, %s28
      %p34 = scmp.eq.s32.totalorder %s15, 0
      %p35 = por %p33, %p34
      %p36 = scmp.ne.s32.totalorder %s25, %s28
      %p37 = scmp.eq.s32.totalorder %s20, 1
      %p38 = por %p36, %p37
      %p39 = scmp.ne.s32.totalorder %s28, %s29
      %p40 = scmp.eq.s32.totalorder %s20, 0
      %p41 = por %p39, %p40
      %p42 = scmp.ne.s32.totalorder %s28, %s29
      %p43 = scmp.eq.s32.totalorder %s21, 1
      %p44 = por %p42, %p43
      %p46 = scmp.ne.s32.totalorder %s29, %s45
      %p47 = scmp.eq.s32.totalorder %s21, 0
      %p48 = por %p46, %p47
      %s50 = sadd.s32 %s49, 1
      %p53 = scmp.eq.s32.totalorder %s15, 1
      %p54 = scmp.ne.s32.totalorder %s49, %s51
      %p55 = scmp.eq.s32.totalorder %s15, 0
      %p56 = por %p54, %p55
      %p57 = scmp.ne.s32.totalorder %s49, %s51
      %p58 = scmp.eq.s32.totalorder %s20, 1
      %p59 = por %p57, %p58
      %p60 = scmp.ne.s32.totalorder %s51, %s52
      %p61 = scmp.eq.s32.totalorder %s20, 0
      %p62 = por %p60, %p61
      %p63 = scmp.ne.s32.totalorder %s51, %s52
      %p64 = scmp.eq.s32.totalorder %s21, 1
      %p65 = por %p63, %p64
      %p67 = scmp.ne.s32.totalorder %s52, %s66
      %p68 = scmp.eq.s32.totalorder %s21, 0
      %p69 = por %p67, %p68
      %s71 = sadd.s32 %s70, 1
      %p74 = scmp.eq.s32.totalorder %s15, 1
      %p75 = scmp.ne.s32.totalorder %s70, %s72
      %p76 = scmp.eq.s32.totalorder %s15, 0
      %p77 = por %p75, %p76
      %p78 = scmp.ne.s32.totalorder %s70, %s72
      %p79 = scmp.eq.s32.totalorder %s20, 1
      %p80 = por %p78, %p79
      %p81 = scmp.ne.s32.totalorder %s72, %s73
      %p82 = scmp.eq.s32.totalorder %s20, 0
      %p83 = por %p81, %p82
      %p84 = scmp.ne.s32.totalorder %s72, %s73
      %p85 = scmp.eq.s32.totalorder %s21, 1
      %p86 = por %p84, %p85
      %p88 = scmp.ne.s32.totalorder %s73, %s87
      %p89 = scmp.eq.s32.totalorder %s21, 0
      %p90 = por %p88, %p89
      %s91 = ssub.s32 %s15, %s22
      %p92 = scmp.eq.s32.totalorder %s91, 0
      %s94 = sadd.s32 %s93, 1
      %s95 = scalar_select %p92, %s93, %s94
      %p98 = pneg %p92
      %p99 = scmp.eq.s32.totalorder %s15, 1
      %p100 = por %p98, %p99
      %p101 = scmp.ne.s32.totalorder %s93, %s96
      %p102 = scmp.eq.s32.totalorder %s15, 0
      %p103 = por %p101, %p102
      %p104 = scmp.ne.s32.totalorder %s93, %s96
      %p105 = scmp.eq.s32.totalorder %s20, 1
      %p106 = por %p104, %p105
      %p107 = scmp.ne.s32.totalorder %s96, %s97
      %p108 = scmp.eq.s32.totalorder %s20, 0
      %p109 = por %p107, %p108
      %p110 = scmp.ne.s32.totalorder %s96, %s97
      %p111 = scmp.eq.s32.totalorder %s21, 1
      %p112 = por %p110, %p111
      %p114 = scmp.ne.s32.totalorder %s97, %s113
      %p115 = scmp.eq.s32.totalorder %s21, 0
      %p116 = por %p114, %p115
      %p117 = scmp.le.s32.totalorder 1, %s15
      %p118 = scmp.lt.s32.totalorder %s15, 3
      %p119 = pnand %p117, %p118
      %p120 = pneg %p119
      // Predicated region
      $region9: #{tpu_custom_call.1} parent=5 // pred_check
        _
      $region10: #{tpu_custom_call.1} parent=5 // pred_check_branch
        %122 = sbr.rel (%p119) target = $region12
      $region11: #{tpu_custom_call.1} parent=5 // pred_region
        %s123 = ssub.s32 %s15, 1
        // Predicated region
        $region13: #{tpu_custom_call.1} parent=11 // pred_check
          %p124 = pneg %p62
        $region14: #{tpu_custom_call.1} parent=11 // pred_check_branch
          %126 = sbr.rel (%p124) target = $region16
        $region15: #{tpu_custom_call.1} parent=11 // pred_region
          _
        $region16: #{tpu_custom_call.1} parent=11 // pred_fallthru
          _
        // Predicated region
        $region17: #{tpu_custom_call.1} parent=11 // pred_check
          %p127 = pneg %p83
        $region18: #{tpu_custom_call.1} parent=11 // pred_check_branch
          %129 = sbr.rel (%p127) target = $region20
        $region19: #{tpu_custom_call.1} parent=11 // pred_region
          _
        $region20: #{tpu_custom_call.1} parent=11 // pred_fallthru
          _
      $region12: #{tpu_custom_call.1} parent=5 // pred_fallthru
        _
      %p130 = scmp.lt.s32.totalorder %s15, 2
      // Predicated region
      $region21: #{tpu_custom_call.1} parent=5 // pred_check
        %p131 = pneg %p130
      $region22: #{tpu_custom_call.1} parent=5 // pred_check_branch
        %133 = sbr.rel (%p131) target = $region24
      $region23: #{tpu_custom_call.1} parent=5 // pred_region
        // Predicated region
        $region25: #{tpu_custom_call.1} parent=23 // pred_check
          %p134 = pneg %p35
        $region26: #{tpu_custom_call.1} parent=23 // pred_check_branch
          %136 = sbr.rel (%p134) target = $region28
        $region27: #{tpu_custom_call.1} parent=23 // pred_region
          %s137 = sand.u32 %s25, 1
          %s138 = scalar_lea.sflag [#allocation3], %s137
          %s139 = sand.u32 %s25, 1
          %s140 = smul.addr %s139, 512
          %s141 = scalar_lea.vmem [#allocation2], %s140
          %s142 = smul.u32 32, %s15
          %s144 = ssub.s32 8192, 8192
          %145 = vsyncadd %s138, %s144
          %s146 = smul.addr %s142, 2
          %s147 = smul.addr %s146, 128
          %s148 = scalar_lea.hbm %s0, %s147
          %s149 = sshll.u32 %s141, 4
          %s150 = int_to_ptr.vmem [resolvable:$true] %s149
          %155 = dma.hbm_to_vmem [thread:$0]  %s148, 8192, %s150, %s138, 256, 256, 16
        $region28: #{tpu_custom_call.1} parent=23 // pred_fallthru
          _
      $region24: #{tpu_custom_call.1} parent=5 // pred_fallthru
        _
      %p156 = scmp.le.s32.totalorder 1, %s15
      %p157 = scmp.lt.s32.totalorder %s15, 3
      %p158 = pnand %p156, %p157
      %p159 = pneg %p158
      // Predicated region
      $region29: #{tpu_custom_call.1} parent=5 // pred_check
        _
      $region30: #{tpu_custom_call.1} parent=5 // pred_check_branch
        %161 = sbr.rel (%p158) target = $region32
      $region31: #{tpu_custom_call.1} parent=5 // pred_region
        %s162 = ssub.s32 %s15, 1
        %s163 = sand.u32 %s28, 1
        %s164 = scalar_lea.sflag [#allocation3], %s163
        %s165 = sand.u32 %s28, 1
        %s166 = smul.addr %s165, 512
        %s167 = scalar_lea.vmem [#allocation2], %s166
        // Predicated region
        $region33: #{tpu_custom_call.1} parent=31 // pred_check
          %p168 = pneg %p41
        $region34: #{tpu_custom_call.1} parent=31 // pred_check_branch
          %170 = sbr.rel (%p168) target = $region36
        $region35: #{tpu_custom_call.1} parent=31 // pred_region
          %171 = dma.done %s164, 8192
        $region36: #{tpu_custom_call.1} parent=31 // pred_fallthru
          _
        %s172 = sand.u32 %s28, 1
        %s173 = scalar_lea.sflag [#allocation3], %s172
        %s174 = sand.u32 %s28, 1
        %s175 = smul.addr %s174, 512
        %s176 = scalar_lea.vmem [#allocation2], %s175
        %p177 = pneg %p41
        %p178 = pneg %p38
        %p179 = pneg %p62
        %p180 = pneg %p59
        %p181 = pneg %p83
        %p182 = pneg %p80
        %p183 = pneg %p109
        %p184 = pneg %p106
        %s185 = sand.u32 %s96, 1
        %s186 = scalar_lea.sflag [#allocation4], %s185
        %s187 = sand.u32 %s96, 1
        %s188 = smul.addr %s187, 512
        %s189 = scalar_lea.vmem [#allocation5], %s188
        %s190 = smul.u32 32, %s20
        %s191 = smul.u32 32, %s20
        %v192 = vld [vmem:[%s167] sm:$0xff]
        %v193 = vld [vmem:[%s167 + $0x8] sm:$0xff]
        %v194 = vld [vmem:[%s167 + $0x10] sm:$0xff]
        %v195 = vld [vmem:[%s167 + $0x18] sm:$0xff]
        %v196 = vld [vmem:[%s167 + $0x20] sm:$0xff]
        %v197 = vld [vmem:[%s167 + $0x28] sm:$0xff]
        %v198 = vld [vmem:[%s167 + $0x30] sm:$0xff]
        %v199 = vld [vmem:[%s167 + $0x38] sm:$0xff]
        %v200 = vld [vmem:[%s167 + $0x40] sm:$0xff]
        %v201 = vld [vmem:[%s167 + $0x48] sm:$0xff]
        %v202 = vld [vmem:[%s167 + $0x50] sm:$0xff]
        %v203 = vld [vmem:[%s167 + $0x58] sm:$0xff]
        %v204 = vld [vmem:[%s167 + $0x60] sm:$0xff]
        %v205 = vld [vmem:[%s167 + $0x68] sm:$0xff]
        %v206 = vld [vmem:[%s167 + $0x70] sm:$0xff]
        %v207 = vld [vmem:[%s167 + $0x78] sm:$0xff]
        %v208 = vld [vmem:[%s167 + $0x80] sm:$0xff]
        %v209 = vld [vmem:[%s167 + $0x88] sm:$0xff]
        %v210 = vld [vmem:[%s167 + $0x90] sm:$0xff]
        %v211 = vld [vmem:[%s167 + $0x98] sm:$0xff]
        %v212 = vld [vmem:[%s167 + $0xa0] sm:$0xff]
        %v213 = vld [vmem:[%s167 + $0xa8] sm:$0xff]
        %v214 = vld [vmem:[%s167 + $0xb0] sm:$0xff]
        %v215 = vld [vmem:[%s167 + $0xb8] sm:$0xff]
        %v216 = vld [vmem:[%s167 + $0xc0] sm:$0xff]
        %v217 = vld [vmem:[%s167 + $0xc8] sm:$0xff]
        %v218 = vld [vmem:[%s167 + $0xd0] sm:$0xff]
        %v219 = vld [vmem:[%s167 + $0xd8] sm:$0xff]
        %v220 = vld [vmem:[%s167 + $0xe0] sm:$0xff]
        %v221 = vld [vmem:[%s167 + $0xe8] sm:$0xff]
        %v222 = vld [vmem:[%s167 + $0xf0] sm:$0xff]
        %v223 = vld [vmem:[%s167 + $0xf8] sm:$0xff]
        %v224 = vld [vmem:[%s167 + $0x100] sm:$0xff]
        %v225 = vld [vmem:[%s167 + $0x108] sm:$0xff]
        %v226 = vld [vmem:[%s167 + $0x110] sm:$0xff]
        %v227 = vld [vmem:[%s167 + $0x118] sm:$0xff]
        %v228 = vld [vmem:[%s167 + $0x120] sm:$0xff]
        %v229 = vld [vmem:[%s167 + $0x128] sm:$0xff]
        %v230 = vld [vmem:[%s167 + $0x130] sm:$0xff]
        %v231 = vld [vmem:[%s167 + $0x138] sm:$0xff]
        %v232 = vld [vmem:[%s167 + $0x140] sm:$0xff]
        %v233 = vld [vmem:[%s167 + $0x148] sm:$0xff]
        %v234 = vld [vmem:[%s167 + $0x150] sm:$0xff]
        %v235 = vld [vmem:[%s167 + $0x158] sm:$0xff]
        %v236 = vld [vmem:[%s167 + $0x160] sm:$0xff]
        %v237 = vld [vmem:[%s167 + $0x168] sm:$0xff]
        %v238 = vld [vmem:[%s167 + $0x170] sm:$0xff]
        %v239 = vld [vmem:[%s167 + $0x178] sm:$0xff]
        %v240 = vld [vmem:[%s167 + $0x180] sm:$0xff]
        %v241 = vld [vmem:[%s167 + $0x188] sm:$0xff]
        %v242 = vld [vmem:[%s167 + $0x190] sm:$0xff]
        %v243 = vld [vmem:[%s167 + $0x198] sm:$0xff]
        %v244 = vld [vmem:[%s167 + $0x1a0] sm:$0xff]
        %v245 = vld [vmem:[%s167 + $0x1a8] sm:$0xff]
        %v246 = vld [vmem:[%s167 + $0x1b0] sm:$0xff]
        %v247 = vld [vmem:[%s167 + $0x1b8] sm:$0xff]
        %v248 = vld [vmem:[%s167 + $0x1c0] sm:$0xff]
        %v249 = vld [vmem:[%s167 + $0x1c8] sm:$0xff]
        %v250 = vld [vmem:[%s167 + $0x1d0] sm:$0xff]
        %v251 = vld [vmem:[%s167 + $0x1d8] sm:$0xff]
        %v252 = vld [vmem:[%s167 + $0x1e0] sm:$0xff]
        %v253 = vld [vmem:[%s167 + $0x1e8] sm:$0xff]
        %v254 = vld [vmem:[%s167 + $0x1f0] sm:$0xff]
        %v255 = vld [vmem:[%s167 + $0x1f8] sm:$0xff]
        %v256 = vadd.f32 %v192, %v193
        %257 = vadd.xlane.f32.xlu0 %v256
        %v258 = vpop.xlane.xlu0 %257
        %v259 = vadd.f32 %v194, %v195
        %260 = vadd.xlane.f32.xlu0 %v259
        %v261 = vpop.xlane.xlu0 %260
        %v262 = vadd.f32 %v196, %v197
        %263 = vadd.xlane.f32.xlu0 %v262
        %v264 = vpop.xlane.xlu0 %263
        %v265 = vadd.f32 %v198, %v199
        %266 = vadd.xlane.f32.xlu0 %v265
        %v267 = vpop.xlane.xlu0 %266
        %v268 = vadd.f32 %v200, %v201
        %269 = vadd.xlane.f32.xlu0 %v268
        %v270 = vpop.xlane.xlu0 %269
        %v271 = vadd.f32 %v202, %v203
        %272 = vadd.xlane.f32.xlu0 %v271
        %v273 = vpop.xlane.xlu0 %272
        %v274 = vadd.f32 %v204, %v205
        %275 = vadd.xlane.f32.xlu0 %v274
        %v276 = vpop.xlane.xlu0 %275
        %v277 = vadd.f32 %v206, %v207
        %278 = vadd.xlane.f32.xlu0 %v277
        %v279 = vpop.xlane.xlu0 %278
        %v280 = vadd.f32 %v208, %v209
        %281 = vadd.xlane.f32.xlu0 %v280
        %v282 = vpop.xlane.xlu0 %281
        %v283 = vadd.f32 %v210, %v211
        %284 = vadd.xlane.f32.xlu0 %v283
        %v285 = vpop.xlane.xlu0 %284
        %v286 = vadd.f32 %v212, %v213
        %287 = vadd.xlane.f32.xlu0 %v286
        %v288 = vpop.xlane.xlu0 %287
        %v289 = vadd.f32 %v214, %v215
        %290 = vadd.xlane.f32.xlu0 %v289
        %v291 = vpop.xlane.xlu0 %290
        %v292 = vadd.f32 %v216, %v217
        %293 = vadd.xlane.f32.xlu0 %v292
        %v294 = vpop.xlane.xlu0 %293
        %v295 = vadd.f32 %v218, %v219
        %296 = vadd.xlane.f32.xlu0 %v295
        %v297 = vpop.xlane.xlu0 %296
        %v298 = vadd.f32 %v220, %v221
        %299 = vadd.xlane.f32.xlu0 %v298
        %v300 = vpop.xlane.xlu0 %299
        %v301 = vadd.f32 %v222, %v223
        %302 = vadd.xlane.f32.xlu0 %v301
        %v303 = vpop.xlane.xlu0 %302
        %v304 = vadd.f32 %v224, %v225
        %305 = vadd.xlane.f32.xlu0 %v304
        %v306 = vpop.xlane.xlu0 %305
        %v307 = vadd.f32 %v226, %v227
        %308 = vadd.xlane.f32.xlu0 %v307
        %v309 = vpop.xlane.xlu0 %308
        %v310 = vadd.f32 %v228, %v229
        %311 = vadd.xlane.f32.xlu0 %v310
        %v312 = vpop.xlane.xlu0 %311
        %v313 = vadd.f32 %v230, %v231
        %314 = vadd.xlane.f32.xlu0 %v313
        %v315 = vpop.xlane.xlu0 %314
        %v316 = vadd.f32 %v232, %v233
        %317 = vadd.xlane.f32.xlu0 %v316
        %v318 = vpop.xlane.xlu0 %317
        %v319 = vadd.f32 %v234, %v235
        %320 = vadd.xlane.f32.xlu0 %v319
        %v321 = vpop.xlane.xlu0 %320
        %v322 = vadd.f32 %v236, %v237
        %323 = vadd.xlane.f32.xlu0 %v322
        %v324 = vpop.xlane.xlu0 %323
        %v325 = vadd.f32 %v238, %v239
        %326 = vadd.xlane.f32.xlu0 %v325
        %v327 = vpop.xlane.xlu0 %326
        %v328 = vadd.f32 %v240, %v241
        %329 = vadd.xlane.f32.xlu0 %v328
        %v330 = vpop.xlane.xlu0 %329
        %v331 = vadd.f32 %v242, %v243
        %332 = vadd.xlane.f32.xlu0 %v331
        %v333 = vpop.xlane.xlu0 %332
        %v334 = vadd.f32 %v244, %v245
        %335 = vadd.xlane.f32.xlu0 %v334
        %v336 = vpop.xlane.xlu0 %335
        %v337 = vadd.f32 %v246, %v247
        %338 = vadd.xlane.f32.xlu0 %v337
        %v339 = vpop.xlane.xlu0 %338
        %v340 = vadd.f32 %v248, %v249
        %341 = vadd.xlane.f32.xlu0 %v340
        %v342 = vpop.xlane.xlu0 %341
        %v343 = vadd.f32 %v250, %v251
        %344 = vadd.xlane.f32.xlu0 %v343
        %v345 = vpop.xlane.xlu0 %344
        %v346 = vadd.f32 %v252, %v253
        %347 = vadd.xlane.f32.xlu0 %v346
        %v348 = vpop.xlane.xlu0 %347
        %v349 = vadd.f32 %v254, %v255
        %350 = vadd.xlane.f32.xlu0 %v349
        %v351 = vpop.xlane.xlu0 %350
        %v352 = vrcp.pop 256.0
        %v353 = vmul.f32 %v258, %v352
        %v354 = vmul.f32 %v261, %v352
        %v355 = vmul.f32 %v264, %v352
        %v356 = vmul.f32 %v267, %v352
        %v357 = vmul.f32 %v270, %v352
        %v358 = vmul.f32 %v273, %v352
        %v359 = vmul.f32 %v276, %v352
        %v360 = vmul.f32 %v279, %v352
        %v361 = vmul.f32 %v282, %v352
        %v362 = vmul.f32 %v285, %v352
        %v363 = vmul.f32 %v288, %v352
        %v364 = vmul.f32 %v291, %v352
        %v365 = vmul.f32 %v294, %v352
        %v366 = vmul.f32 %v297, %v352
        %v367 = vmul.f32 %v300, %v352
        %v368 = vmul.f32 %v303, %v352
        %v369 = vmul.f32 %v306, %v352
        %v370 = vmul.f32 %v309, %v352
        %v371 = vmul.f32 %v312, %v352
        %v372 = vmul.f32 %v315, %v352
        %v373 = vmul.f32 %v318, %v352
        %v374 = vmul.f32 %v321, %v352
        %v375 = vmul.f32 %v324, %v352
        %v376 = vmul.f32 %v327, %v352
        %v377 = vmul.f32 %v330, %v352
        %v378 = vmul.f32 %v333, %v352
        %v379 = vmul.f32 %v336, %v352
        %v380 = vmul.f32 %v339, %v352
        %v381 = vmul.f32 %v342, %v352
        %v382 = vmul.f32 %v345, %v352
        %v383 = vmul.f32 %v348, %v352
        %v384 = vmul.f32 %v351, %v352
        %v385 = vsub.f32 %v192, %v353
        %v386 = vsub.f32 %v193, %v353
        %v387 = vsub.f32 %v194, %v354
        %v388 = vsub.f32 %v195, %v354
        %v389 = vsub.f32 %v196, %v355
        %v390 = vsub.f32 %v197, %v355
        %v391 = vsub.f32 %v198, %v356
        %v392 = vsub.f32 %v199, %v356
        %v393 = vsub.f32 %v200, %v357
        %v394 = vsub.f32 %v201, %v357
        %v395 = vsub.f32 %v202, %v358
        %v396 = vsub.f32 %v203, %v358
        %v397 = vsub.f32 %v204, %v359
        %v398 = vsub.f32 %v205, %v359
        %v399 = vsub.f32 %v206, %v360
        %v400 = vsub.f32 %v207, %v360
        %v401 = vsub.f32 %v208, %v361
        %v402 = vsub.f32 %v209, %v361
        %v403 = vsub.f32 %v210, %v362
        %v404 = vsub.f32 %v211, %v362
        %v405 = vsub.f32 %v212, %v363
        %v406 = vsub.f32 %v213, %v363
        %v407 = vsub.f32 %v214, %v364
        %v408 = vsub.f32 %v215, %v364
        %v409 = vsub.f32 %v216, %v365
        %v410 = vsub.f32 %v217, %v365
        %v411 = vsub.f32 %v218, %v366
        %v412 = vsub.f32 %v219, %v366
        %v413 = vsub.f32 %v220, %v367
        %v414 = vsub.f32 %v221, %v367
        %v415 = vsub.f32 %v222, %v368
        %v416 = vsub.f32 %v223, %v368
        %v417 = vsub.f32 %v224, %v369
        %v418 = vsub.f32 %v225, %v369
        %v419 = vsub.f32 %v226, %v370
        %v420 = vsub.f32 %v227, %v370
        %v421 = vsub.f32 %v228, %v371
        %v422 = vsub.f32 %v229, %v371
        %v423 = vsub.f32 %v230, %v372
        %v424 = vsub.f32 %v231, %v372
        %v425 = vsub.f32 %v232, %v373
        %v426 = vsub.f32 %v233, %v373
        %v427 = vsub.f32 %v234, %v374
        %v428 = vsub.f32 %v235, %v374
        %v429 = vsub.f32 %v236, %v375
        %v430 = vsub.f32 %v237, %v375
        %v431 = vsub.f32 %v238, %v376
        %v432 = vsub.f32 %v239, %v376
        %v433 = vsub.f32 %v240, %v377
        %v434 = vsub.f32 %v241, %v377
        %v435 = vsub.f32 %v242, %v378
        %v436 = vsub.f32 %v243, %v378
        %v437 = vsub.f32 %v244, %v379
        %v438 = vsub.f32 %v245, %v379
        %v439 = vsub.f32 %v246, %v380
        %v440 = vsub.f32 %v247, %v380
        %v441 = vsub.f32 %v248, %v381
        %v442 = vsub.f32 %v249, %v381
        %v443 = vsub.f32 %v250, %v382
        %v444 = vsub.f32 %v251, %v382
        %v445 = vsub.f32 %v252, %v383
        %v446 = vsub.f32 %v253, %v383
        %v447 = vsub.f32 %v254, %v384
        %v448 = vsub.f32 %v255, %v384
        %v449 = vmul.f32 %v385, %v385
        %v450 = vmul.f32 %v386, %v386
        %v451 = vmul.f32 %v387, %v387
        %v452 = vmul.f32 %v388, %v388
        %v453 = vmul.f32 %v389, %v389
        %v454 = vmul.f32 %v390, %v390
        %v455 = vmul.f32 %v391, %v391
        %v456 = vmul.f32 %v392, %v392
        %v457 = vmul.f32 %v393, %v393
        %v458 = vmul.f32 %v394, %v394
        %v459 = vmul.f32 %v395, %v395
        %v460 = vmul.f32 %v396, %v396
        %v461 = vmul.f32 %v397, %v397
        %v462 = vmul.f32 %v398, %v398
        %v463 = vmul.f32 %v399, %v399
        %v464 = vmul.f32 %v400, %v400
        %v465 = vmul.f32 %v401, %v401
        %v466 = vmul.f32 %v402, %v402
        %v467 = vmul.f32 %v403, %v403
        %v468 = vmul.f32 %v404, %v404
        %v469 = vmul.f32 %v405, %v405
        %v470 = vmul.f32 %v406, %v406
        %v471 = vmul.f32 %v407, %v407
        %v472 = vmul.f32 %v408, %v408
        %v473 = vmul.f32 %v409, %v409
        %v474 = vmul.f32 %v410, %v410
        %v475 = vmul.f32 %v411, %v411
        %v476 = vmul.f32 %v412, %v412
        %v477 = vmul.f32 %v413, %v413
        %v478 = vmul.f32 %v414, %v414
        %v479 = vmul.f32 %v415, %v415
        %v480 = vmul.f32 %v416, %v416
        %v481 = vmul.f32 %v417, %v417
        %v482 = vmul.f32 %v418, %v418
        %v483 = vmul.f32 %v419, %v419
        %v484 = vmul.f32 %v420, %v420
        %v485 = vmul.f32 %v421, %v421
        %v486 = vmul.f32 %v422, %v422
        %v487 = vmul.f32 %v423, %v423
        %v488 = vmul.f32 %v424, %v424
        %v489 = vmul.f32 %v425, %v425
        %v490 = vmul.f32 %v426, %v426
        %v491 = vmul.f32 %v427, %v427
        %v492 = vmul.f32 %v428, %v428
        %v493 = vmul.f32 %v429, %v429
        %v494 = vmul.f32 %v430, %v430
        %v495 = vmul.f32 %v431, %v431
        %v496 = vmul.f32 %v432, %v432
        %v497 = vmul.f32 %v433, %v433
        %v498 = vmul.f32 %v434, %v434
        %v499 = vmul.f32 %v435, %v435
        %v500 = vmul.f32 %v436, %v436
        %v501 = vmul.f32 %v437, %v437
        %v502 = vmul.f32 %v438, %v438
        %v503 = vmul.f32 %v439, %v439
        %v504 = vmul.f32 %v440, %v440
        %v505 = vmul.f32 %v441, %v441
        %v506 = vmul.f32 %v442, %v442
        %v507 = vmul.f32 %v443, %v443
        %v508 = vmul.f32 %v444, %v444
        %v509 = vmul.f32 %v445, %v445
        %v510 = vmul.f32 %v446, %v446
        %v511 = vmul.f32 %v447, %v447
        %v512 = vmul.f32 %v448, %v448
        %v513 = vadd.f32 %v449, %v450
        %514 = vadd.xlane.f32.xlu0 %v513
        %v515 = vpop.xlane.xlu0 %514
        %v516 = vadd.f32 %v451, %v452
        %517 = vadd.xlane.f32.xlu0 %v516
        %v518 = vpop.xlane.xlu0 %517
        %v519 = vadd.f32 %v453, %v454
        %520 = vadd.xlane.f32.xlu0 %v519
        %v521 = vpop.xlane.xlu0 %520
        %v522 = vadd.f32 %v455, %v456
        %523 = vadd.xlane.f32.xlu0 %v522
        %v524 = vpop.xlane.xlu0 %523
        %v525 = vadd.f32 %v457, %v458
        %526 = vadd.xlane.f32.xlu0 %v525
        %v527 = vpop.xlane.xlu0 %526
        %v528 = vadd.f32 %v459, %v460
        %529 = vadd.xlane.f32.xlu0 %v528
        %v530 = vpop.xlane.xlu0 %529
        %v531 = vadd.f32 %v461, %v462
        %532 = vadd.xlane.f32.xlu0 %v531
        %v533 = vpop.xlane.xlu0 %532
        %v534 = vadd.f32 %v463, %v464
        %535 = vadd.xlane.f32.xlu0 %v534
        %v536 = vpop.xlane.xlu0 %535
        %v537 = vadd.f32 %v465, %v466
        %538 = vadd.xlane.f32.xlu0 %v537
        %v539 = vpop.xlane.xlu0 %538
        %v540 = vadd.f32 %v467, %v468
        %541 = vadd.xlane.f32.xlu0 %v540
        %v542 = vpop.xlane.xlu0 %541
        %v543 = vadd.f32 %v469, %v470
        %544 = vadd.xlane.f32.xlu0 %v543
        %v545 = vpop.xlane.xlu0 %544
        %v546 = vadd.f32 %v471, %v472
        %547 = vadd.xlane.f32.xlu0 %v546
        %v548 = vpop.xlane.xlu0 %547
        %v549 = vadd.f32 %v473, %v474
        %550 = vadd.xlane.f32.xlu0 %v549
        %v551 = vpop.xlane.xlu0 %550
        %v552 = vadd.f32 %v475, %v476
        %553 = vadd.xlane.f32.xlu0 %v552
        %v554 = vpop.xlane.xlu0 %553
        %v555 = vadd.f32 %v477, %v478
        %556 = vadd.xlane.f32.xlu0 %v555
        %v557 = vpop.xlane.xlu0 %556
        %v558 = vadd.f32 %v479, %v480
        %559 = vadd.xlane.f32.xlu0 %v558
        %v560 = vpop.xlane.xlu0 %559
        %v561 = vadd.f32 %v481, %v482
        %562 = vadd.xlane.f32.xlu0 %v561
        %v563 = vpop.xlane.xlu0 %562
        %v564 = vadd.f32 %v483, %v484
        %565 = vadd.xlane.f32.xlu0 %v564
        %v566 = vpop.xlane.xlu0 %565
        %v567 = vadd.f32 %v485, %v486
        %568 = vadd.xlane.f32.xlu0 %v567
        %v569 = vpop.xlane.xlu0 %568
        %v570 = vadd.f32 %v487, %v488
        %571 = vadd.xlane.f32.xlu0 %v570
        %v572 = vpop.xlane.xlu0 %571
        %v573 = vadd.f32 %v489, %v490
        %574 = vadd.xlane.f32.xlu0 %v573
        %v575 = vpop.xlane.xlu0 %574
        %v576 = vadd.f32 %v491, %v492
        %577 = vadd.xlane.f32.xlu0 %v576
        %v578 = vpop.xlane.xlu0 %577
        %v579 = vadd.f32 %v493, %v494
        %580 = vadd.xlane.f32.xlu0 %v579
        %v581 = vpop.xlane.xlu0 %580
        %v582 = vadd.f32 %v495, %v496
        %583 = vadd.xlane.f32.xlu0 %v582
        %v584 = vpop.xlane.xlu0 %583
        %v585 = vadd.f32 %v497, %v498
        %586 = vadd.xlane.f32.xlu0 %v585
        %v587 = vpop.xlane.xlu0 %586
        %v588 = vadd.f32 %v499, %v500
        %589 = vadd.xlane.f32.xlu0 %v588
        %v590 = vpop.xlane.xlu0 %589
        %v591 = vadd.f32 %v501, %v502
        %592 = vadd.xlane.f32.xlu0 %v591
        %v593 = vpop.xlane.xlu0 %592
        %v594 = vadd.f32 %v503, %v504
        %595 = vadd.xlane.f32.xlu0 %v594
        %v596 = vpop.xlane.xlu0 %595
        %v597 = vadd.f32 %v505, %v506
        %598 = vadd.xlane.f32.xlu0 %v597
        %v599 = vpop.xlane.xlu0 %598
        %v600 = vadd.f32 %v507, %v508
        %601 = vadd.xlane.f32.xlu0 %v600
        %v602 = vpop.xlane.xlu0 %601
        %v603 = vadd.f32 %v509, %v510
        %604 = vadd.xlane.f32.xlu0 %v603
        %v605 = vpop.xlane.xlu0 %604
        %v606 = vadd.f32 %v511, %v512
        %607 = vadd.xlane.f32.xlu0 %v606
        %v608 = vpop.xlane.xlu0 %607
        %v609 = vmul.f32 %v515, %v352
        %v610 = vmul.f32 %v518, %v352
        %v611 = vmul.f32 %v521, %v352
        %v612 = vmul.f32 %v524, %v352
        %v613 = vmul.f32 %v527, %v352
        %v614 = vmul.f32 %v530, %v352
        %v615 = vmul.f32 %v533, %v352
        %v616 = vmul.f32 %v536, %v352
        %v617 = vmul.f32 %v539, %v352
        %v618 = vmul.f32 %v542, %v352
        %v619 = vmul.f32 %v545, %v352
        %v620 = vmul.f32 %v548, %v352
        %v621 = vmul.f32 %v551, %v352
        %v622 = vmul.f32 %v554, %v352
        %v623 = vmul.f32 %v557, %v352
        %v624 = vmul.f32 %v560, %v352
        %v625 = vmul.f32 %v563, %v352
        %v626 = vmul.f32 %v566, %v352
        %v627 = vmul.f32 %v569, %v352
        %v628 = vmul.f32 %v572, %v352
        %v629 = vmul.f32 %v575, %v352
        %v630 = vmul.f32 %v578, %v352
        %v631 = vmul.f32 %v581, %v352
        %v632 = vmul.f32 %v584, %v352
        %v633 = vmul.f32 %v587, %v352
        %v634 = vmul.f32 %v590, %v352
        %v635 = vmul.f32 %v593, %v352
        %v636 = vmul.f32 %v596, %v352
        %v637 = vmul.f32 %v599, %v352
        %v638 = vmul.f32 %v602, %v352
        %v639 = vmul.f32 %v605, %v352
        %v640 = vmul.f32 %v608, %v352
        %v641 = vadd.f32 %v609, 1e-05
        %v642 = vadd.f32 %v610, 1e-05
        %v643 = vadd.f32 %v611, 1e-05
        %v644 = vadd.f32 %v612, 1e-05
        %v645 = vadd.f32 %v613, 1e-05
        %v646 = vadd.f32 %v614, 1e-05
        %v647 = vadd.f32 %v615, 1e-05
        %v648 = vadd.f32 %v616, 1e-05
        %v649 = vadd.f32 %v617, 1e-05
        %v650 = vadd.f32 %v618, 1e-05
        %v651 = vadd.f32 %v619, 1e-05
        %v652 = vadd.f32 %v620, 1e-05
        %v653 = vadd.f32 %v621, 1e-05
        %v654 = vadd.f32 %v622, 1e-05
        %v655 = vadd.f32 %v623, 1e-05
        %v656 = vadd.f32 %v624, 1e-05
        %v657 = vadd.f32 %v625, 1e-05
        %v658 = vadd.f32 %v626, 1e-05
        %v659 = vadd.f32 %v627, 1e-05
        %v660 = vadd.f32 %v628, 1e-05
        %v661 = vadd.f32 %v629, 1e-05
        %v662 = vadd.f32 %v630, 1e-05
        %v663 = vadd.f32 %v631, 1e-05
        %v664 = vadd.f32 %v632, 1e-05
        %v665 = vadd.f32 %v633, 1e-05
        %v666 = vadd.f32 %v634, 1e-05
        %v667 = vadd.f32 %v635, 1e-05
        %v668 = vadd.f32 %v636, 1e-05
        %v669 = vadd.f32 %v637, 1e-05
        %v670 = vadd.f32 %v638, 1e-05
        %v671 = vadd.f32 %v639, 1e-05
        %v672 = vadd.f32 %v640, 1e-05
        %v673 = vrsqrt.pop %v641
        %v674 = vrsqrt.pop %v642
        %v675 = vrsqrt.pop %v643
        %v676 = vrsqrt.pop %v644
        %v677 = vrsqrt.pop %v645
        %v678 = vrsqrt.pop %v646
        %v679 = vrsqrt.pop %v647
        %v680 = vrsqrt.pop %v648
        %v681 = vrsqrt.pop %v649
        %v682 = vrsqrt.pop %v650
        %v683 = vrsqrt.pop %v651
        %v684 = vrsqrt.pop %v652
        %v685 = vrsqrt.pop %v653
        %v686 = vrsqrt.pop %v654
        %v687 = vrsqrt.pop %v655
        %v688 = vrsqrt.pop %v656
        %v689 = vrsqrt.pop %v657
        %v690 = vrsqrt.pop %v658
        %v691 = vrsqrt.pop %v659
        %v692 = vrsqrt.pop %v660
        %v693 = vrsqrt.pop %v661
        %v694 = vrsqrt.pop %v662
        %v695 = vrsqrt.pop %v663
        %v696 = vrsqrt.pop %v664
        %v697 = vrsqrt.pop %v665
        %v698 = vrsqrt.pop %v666
        %v699 = vrsqrt.pop %v667
        %v700 = vrsqrt.pop %v668
        %v701 = vrsqrt.pop %v669
        %v702 = vrsqrt.pop %v670
        %v703 = vrsqrt.pop %v671
        %v704 = vrsqrt.pop %v672
        %v705 = vld [vmem:[%s1] sm:$0x3]
        %v706 = vld [vmem:[%s2] sm:$0x3]
        %v707 = vmul.f32 %v385, %v673
        %v708 = vmul.f32 %v386, %v673
        %v709 = vmul.f32 %v387, %v674
        %v710 = vmul.f32 %v388, %v674
        %v711 = vmul.f32 %v389, %v675
        %v712 = vmul.f32 %v390, %v675
        %v713 = vmul.f32 %v391, %v676
        %v714 = vmul.f32 %v392, %v676
        %v715 = vmul.f32 %v393, %v677
        %v716 = vmul.f32 %v394, %v677
        %v717 = vmul.f32 %v395, %v678
        %v718 = vmul.f32 %v396, %v678
        %v719 = vmul.f32 %v397, %v679
        %v720 = vmul.f32 %v398, %v679
        %v721 = vmul.f32 %v399, %v680
        %v722 = vmul.f32 %v400, %v680
        %v723 = vmul.f32 %v401, %v681
        %v724 = vmul.f32 %v402, %v681
        %v725 = vmul.f32 %v403, %v682
        %v726 = vmul.f32 %v404, %v682
        %v727 = vmul.f32 %v405, %v683
        %v728 = vmul.f32 %v406, %v683
        %v729 = vmul.f32 %v407, %v684
        %v730 = vmul.f32 %v408, %v684
        %v731 = vmul.f32 %v409, %v685
        %v732 = vmul.f32 %v410, %v685
        %v733 = vmul.f32 %v411, %v686
        %v734 = vmul.f32 %v412, %v686
        %v735 = vmul.f32 %v413, %v687
        %v736 = vmul.f32 %v414, %v687
        %v737 = vmul.f32 %v415, %v688
        %v738 = vmul.f32 %v416, %v688
        %v739 = vmul.f32 %v417, %v689
        %v740 = vmul.f32 %v418, %v689
        %v741 = vmul.f32 %v419, %v690
        %v742 = vmul.f32 %v420, %v690
        %v743 = vmul.f32 %v421, %v691
        %v744 = vmul.f32 %v422, %v691
        %v745 = vmul.f32 %v423, %v692
        %v746 = vmul.f32 %v424, %v692
        %v747 = vmul.f32 %v425, %v693
        %v748 = vmul.f32 %v426, %v693
        %v749 = vmul.f32 %v427, %v694
        %v750 = vmul.f32 %v428, %v694
        %v751 = vmul.f32 %v429, %v695
        %v752 = vmul.f32 %v430, %v695
        %v753 = vmul.f32 %v431, %v696
        %v754 = vmul.f32 %v432, %v696
        %v755 = vmul.f32 %v433, %v697
        %v756 = vmul.f32 %v434, %v697
        %v757 = vmul.f32 %v435, %v698
        %v758 = vmul.f32 %v436, %v698
        %v759 = vmul.f32 %v437, %v699
        %v760 = vmul.f32 %v438, %v699
        %v761 = vmul.f32 %v439, %v700
        %v762 = vmul.f32 %v440, %v700
        %v763 = vmul.f32 %v441, %v701
        %v764 = vmul.f32 %v442, %v701
        %v765 = vmul.f32 %v443, %v702
        %v766 = vmul.f32 %v444, %v702
        %v767 = vmul.f32 %v445, %v703
        %v768 = vmul.f32 %v446, %v703
        %v769 = vmul.f32 %v447, %v704
        %v770 = vmul.f32 %v448, %v704
        %v772 = vlaneseq
        %v773 = vshrl.u32 %v772, 7
        %v774 = vsub.s32 0, %v773
        %v775 = vrot.slane %v705, %v774
        %v776 = vlaneseq
        %v777 = vshrl.u32 %v776, 7
        %v778 = vsub.s32 1, %v777
        %v779 = vrot.slane %v705, %v778
        %v782 = vmul.f32 %v707, %v775
        %v783 = vmul.f32 %v708, %v779
        %v784 = vmul.f32 %v709, %v775
        %v785 = vmul.f32 %v710, %v779
        %v786 = vmul.f32 %v711, %v775
        %v787 = vmul.f32 %v712, %v779
        %v788 = vmul.f32 %v713, %v775
        %v789 = vmul.f32 %v714, %v779
        %v790 = vmul.f32 %v715, %v775
        %v791 = vmul.f32 %v716, %v779
        %v792 = vmul.f32 %v717, %v775
        %v793 = vmul.f32 %v718, %v779
        %v794 = vmul.f32 %v719, %v775
        %v795 = vmul.f32 %v720, %v779
        %v796 = vmul.f32 %v721, %v775
        %v797 = vmul.f32 %v722, %v779
        %v798 = vmul.f32 %v723, %v775
        %v799 = vmul.f32 %v724, %v779
        %v800 = vmul.f32 %v725, %v775
        %v801 = vmul.f32 %v726, %v779
        %v802 = vmul.f32 %v727, %v775
        %v803 = vmul.f32 %v728, %v779
        %v804 = vmul.f32 %v729, %v775
        %v805 = vmul.f32 %v730, %v779
        %v806 = vmul.f32 %v731, %v775
        %v807 = vmul.f32 %v732, %v779
        %v808 = vmul.f32 %v733, %v775
        %v809 = vmul.f32 %v734, %v779
        %v810 = vmul.f32 %v735, %v775
        %v811 = vmul.f32 %v736, %v779
        %v812 = vmul.f32 %v737, %v775
        %v813 = vmul.f32 %v738, %v779
        %v814 = vmul.f32 %v739, %v775
        %v815 = vmul.f32 %v740, %v779
        %v816 = vmul.f32 %v741, %v775
        %v817 = vmul.f32 %v742, %v779
        %v818 = vmul.f32 %v743, %v775
        %v819 = vmul.f32 %v744, %v779
        %v820 = vmul.f32 %v745, %v775
        %v821 = vmul.f32 %v746, %v779
        %v822 = vmul.f32 %v747, %v775
        %v823 = vmul.f32 %v748, %v779
        %v824 = vmul.f32 %v749, %v775
        %v825 = vmul.f32 %v750, %v779
        %v826 = vmul.f32 %v751, %v775
        %v827 = vmul.f32 %v752, %v779
        %v828 = vmul.f32 %v753, %v775
        %v829 = vmul.f32 %v754, %v779
        %v830 = vmul.f32 %v755, %v775
        %v831 = vmul.f32 %v756, %v779
        %v832 = vmul.f32 %v757, %v775
        %v833 = vmul.f32 %v758, %v779
        %v834 = vmul.f32 %v759, %v775
        %v835 = vmul.f32 %v760, %v779
        %v836 = vmul.f32 %v761, %v775
        %v837 = vmul.f32 %v762, %v779
        %v838 = vmul.f32 %v763, %v775
        %v839 = vmul.f32 %v764, %v779
        %v840 = vmul.f32 %v765, %v775
        %v841 = vmul.f32 %v766, %v779
        %v842 = vmul.f32 %v767, %v775
        %v843 = vmul.f32 %v768, %v779
        %v844 = vmul.f32 %v769, %v775
        %v845 = vmul.f32 %v770, %v779
        %v847 = vlaneseq
        %v848 = vshrl.u32 %v847, 7
        %v849 = vsub.s32 0, %v848
        %v850 = vrot.slane %v706, %v849
        %v851 = vlaneseq
        %v852 = vshrl.u32 %v851, 7
        %v853 = vsub.s32 1, %v852
        %v854 = vrot.slane %v706, %v853
        %v857 = vadd.f32 %v782, %v850
        %v858 = vadd.f32 %v783, %v854
        %v859 = vadd.f32 %v784, %v850
        %v860 = vadd.f32 %v785, %v854
        %v861 = vadd.f32 %v786, %v850
        %v862 = vadd.f32 %v787, %v854
        %v863 = vadd.f32 %v788, %v850
        %v864 = vadd.f32 %v789, %v854
        %v865 = vadd.f32 %v790, %v850
        %v866 = vadd.f32 %v791, %v854
        %v867 = vadd.f32 %v792, %v850
        %v868 = vadd.f32 %v793, %v854
        %v869 = vadd.f32 %v794, %v850
        %v870 = vadd.f32 %v795, %v854
        %v871 = vadd.f32 %v796, %v850
        %v872 = vadd.f32 %v797, %v854
        %v873 = vadd.f32 %v798, %v850
        %v874 = vadd.f32 %v799, %v854
        %v875 = vadd.f32 %v800, %v850
        %v876 = vadd.f32 %v801, %v854
        %v877 = vadd.f32 %v802, %v850
        %v878 = vadd.f32 %v803, %v854
        %v879 = vadd.f32 %v804, %v850
        %v880 = vadd.f32 %v805, %v854
        %v881 = vadd.f32 %v806, %v850
        %v882 = vadd.f32 %v807, %v854
        %v883 = vadd.f32 %v808, %v850
        %v884 = vadd.f32 %v809, %v854
        %v885 = vadd.f32 %v810, %v850
        %v886 = vadd.f32 %v811, %v854
        %v887 = vadd.f32 %v812, %v850
        %v888 = vadd.f32 %v813, %v854
        %v889 = vadd.f32 %v814, %v850
        %v890 = vadd.f32 %v815, %v854
        %v891 = vadd.f32 %v816, %v850
        %v892 = vadd.f32 %v817, %v854
        %v893 = vadd.f32 %v818, %v850
        %v894 = vadd.f32 %v819, %v854
        %v895 = vadd.f32 %v820, %v850
        %v896 = vadd.f32 %v821, %v854
        %v897 = vadd.f32 %v822, %v850
        %v898 = vadd.f32 %v823, %v854
        %v899 = vadd.f32 %v824, %v850
        %v900 = vadd.f32 %v825, %v854
        %v901 = vadd.f32 %v826, %v850
        %v902 = vadd.f32 %v827, %v854
        %v903 = vadd.f32 %v828, %v850
        %v904 = vadd.f32 %v829, %v854
        %v905 = vadd.f32 %v830, %v850
        %v906 = vadd.f32 %v831, %v854
        %v907 = vadd.f32 %v832, %v850
        %v908 = vadd.f32 %v833, %v854
        %v909 = vadd.f32 %v834, %v850
        %v910 = vadd.f32 %v835, %v854
        %v911 = vadd.f32 %v836, %v850
        %v912 = vadd.f32 %v837, %v854
        %v913 = vadd.f32 %v838, %v850
        %v914 = vadd.f32 %v839, %v854
        %v915 = vadd.f32 %v840, %v850
        %v916 = vadd.f32 %v841, %v854
        %v917 = vadd.f32 %v842, %v850
        %v918 = vadd.f32 %v843, %v854
        %v919 = vadd.f32 %v844, %v850
        %v920 = vadd.f32 %v845, %v854
        %921 = vst [vmem:[%s189] sm:$0xff] %v857
        %922 = vst [vmem:[%s189 + $0x8] sm:$0xff] %v858
        %923 = vst [vmem:[%s189 + $0x10] sm:$0xff] %v859
        %924 = vst [vmem:[%s189 + $0x18] sm:$0xff] %v860
        %925 = vst [vmem:[%s189 + $0x20] sm:$0xff] %v861
        %926 = vst [vmem:[%s189 + $0x28] sm:$0xff] %v862
        %927 = vst [vmem:[%s189 + $0x30] sm:$0xff] %v863
        %928 = vst [vmem:[%s189 + $0x38] sm:$0xff] %v864
        %929 = vst [vmem:[%s189 + $0x40] sm:$0xff] %v865
        %930 = vst [vmem:[%s189 + $0x48] sm:$0xff] %v866
        %931 = vst [vmem:[%s189 + $0x50] sm:$0xff] %v867
        %932 = vst [vmem:[%s189 + $0x58] sm:$0xff] %v868
        %933 = vst [vmem:[%s189 + $0x60] sm:$0xff] %v869
        %934 = vst [vmem:[%s189 + $0x68] sm:$0xff] %v870
        %935 = vst [vmem:[%s189 + $0x70] sm:$0xff] %v871
        %936 = vst [vmem:[%s189 + $0x78] sm:$0xff] %v872
        %937 = vst [vmem:[%s189 + $0x80] sm:$0xff] %v873
        %938 = vst [vmem:[%s189 + $0x88] sm:$0xff] %v874
        %939 = vst [vmem:[%s189 + $0x90] sm:$0xff] %v875
        %940 = vst [vmem:[%s189 + $0x98] sm:$0xff] %v876
        %941 = vst [vmem:[%s189 + $0xa0] sm:$0xff] %v877
        %942 = vst [vmem:[%s189 + $0xa8] sm:$0xff] %v878
        %943 = vst [vmem:[%s189 + $0xb0] sm:$0xff] %v879
        %944 = vst [vmem:[%s189 + $0xb8] sm:$0xff] %v880
        %945 = vst [vmem:[%s189 + $0xc0] sm:$0xff] %v881
        %946 = vst [vmem:[%s189 + $0xc8] sm:$0xff] %v882
        %947 = vst [vmem:[%s189 + $0xd0] sm:$0xff] %v883
        %948 = vst [vmem:[%s189 + $0xd8] sm:$0xff] %v884
        %949 = vst [vmem:[%s189 + $0xe0] sm:$0xff] %v885
        %950 = vst [vmem:[%s189 + $0xe8] sm:$0xff] %v886
        %951 = vst [vmem:[%s189 + $0xf0] sm:$0xff] %v887
        %952 = vst [vmem:[%s189 + $0xf8] sm:$0xff] %v888
        %953 = vst [vmem:[%s189 + $0x100] sm:$0xff] %v889
        %954 = vst [vmem:[%s189 + $0x108] sm:$0xff] %v890
        %955 = vst [vmem:[%s189 + $0x110] sm:$0xff] %v891
        %956 = vst [vmem:[%s189 + $0x118] sm:$0xff] %v892
        %957 = vst [vmem:[%s189 + $0x120] sm:$0xff] %v893
        %958 = vst [vmem:[%s189 + $0x128] sm:$0xff] %v894
        %959 = vst [vmem:[%s189 + $0x130] sm:$0xff] %v895
        %960 = vst [vmem:[%s189 + $0x138] sm:$0xff] %v896
        %961 = vst [vmem:[%s189 + $0x140] sm:$0xff] %v897
        %962 = vst [vmem:[%s189 + $0x148] sm:$0xff] %v898
        %963 = vst [vmem:[%s189 + $0x150] sm:$0xff] %v899
        %964 = vst [vmem:[%s189 + $0x158] sm:$0xff] %v900
        %965 = vst [vmem:[%s189 + $0x160] sm:$0xff] %v901
        %966 = vst [vmem:[%s189 + $0x168] sm:$0xff] %v902
        %967 = vst [vmem:[%s189 + $0x170] sm:$0xff] %v903
        %968 = vst [vmem:[%s189 + $0x178] sm:$0xff] %v904
        %969 = vst [vmem:[%s189 + $0x180] sm:$0xff] %v905
        %970 = vst [vmem:[%s189 + $0x188] sm:$0xff] %v906
        %971 = vst [vmem:[%s189 + $0x190] sm:$0xff] %v907
        %972 = vst [vmem:[%s189 + $0x198] sm:$0xff] %v908
        %973 = vst [vmem:[%s189 + $0x1a0] sm:$0xff] %v909
        %974 = vst [vmem:[%s189 + $0x1a8] sm:$0xff] %v910
        %975 = vst [vmem:[%s189 + $0x1b0] sm:$0xff] %v911
        %976 = vst [vmem:[%s189 + $0x1b8] sm:$0xff] %v912
        %977 = vst [vmem:[%s189 + $0x1c0] sm:$0xff] %v913
        %978 = vst [vmem:[%s189 + $0x1c8] sm:$0xff] %v914
        %979 = vst [vmem:[%s189 + $0x1d0] sm:$0xff] %v915
        %980 = vst [vmem:[%s189 + $0x1d8] sm:$0xff] %v916
        %981 = vst [vmem:[%s189 + $0x1e0] sm:$0xff] %v917
        %982 = vst [vmem:[%s189 + $0x1e8] sm:$0xff] %v918
        %983 = vst [vmem:[%s189 + $0x1f0] sm:$0xff] %v919
        %984 = vst [vmem:[%s189 + $0x1f8] sm:$0xff] %v920
        %s985 = sand.u32 %s96, 1
        %s986 = scalar_lea.sflag [#allocation4], %s985
        %s987 = sand.u32 %s96, 1
        %s988 = smul.addr %s987, 512
        %s989 = scalar_lea.vmem [#allocation5], %s988
        // Predicated region
        $region37: #{tpu_custom_call.1} parent=31 // pred_check
          %p990 = pneg %p106
        $region38: #{tpu_custom_call.1} parent=31 // pred_check_branch
          %992 = sbr.rel (%p990) target = $region40
        $region39: #{tpu_custom_call.1} parent=31 // pred_region
          %s993 = smul.u32 32, %s20
          %s995 = ssub.s32 8192, 8192
          %996 = vsyncadd %s986, %s995
          %s997 = smul.addr %s993, 2
          %s998 = smul.addr %s997, 128
          %s999 = scalar_lea.hbm %s3, %s998
          %s1000 = sshll.u32 %s989, 4
          %s1001 = int_to_ptr.vmem [resolvable:$true] %s1000
          %1006 = dma.vmem_to_hbm [thread:$0]  %s1001, 8192, %s999, %s986, 256, 256, 16
        $region40: #{tpu_custom_call.1} parent=31 // pred_fallthru
          _
      $region32: #{tpu_custom_call.1} parent=5 // pred_fallthru
        _
      %p1007 = scmp.le.s32.totalorder 2, %s15
      // Predicated region
      $region41: #{tpu_custom_call.1} parent=5 // pred_check
        %p1008 = pneg %p1007
      $region42: #{tpu_custom_call.1} parent=5 // pred_check_branch
        %1010 = sbr.rel (%p1008) target = $region44
      $region43: #{tpu_custom_call.1} parent=5 // pred_region
        %s1011 = ssub.s32 %s15, 2
        // Predicated region
        $region45: #{tpu_custom_call.1} parent=43 // pred_check
          %p1012 = pneg %p112
        $region46: #{tpu_custom_call.1} parent=43 // pred_check_branch
          %1014 = sbr.rel (%p1012) target = $region48
        $region47: #{tpu_custom_call.1} parent=43 // pred_region
          %s1015 = sand.u32 %s97, 1
          %s1016 = scalar_lea.sflag [#allocation4], %s1015
          %s1017 = sand.u32 %s97, 1
          %s1018 = smul.addr %s1017, 512
          %s1019 = scalar_lea.vmem [#allocation5], %s1018
          %1020 = dma.done %s1016, 8192
        $region48: #{tpu_custom_call.1} parent=43 // pred_fallthru
          _
      $region44: #{tpu_custom_call.1} parent=5 // pred_fallthru
        _
    $region6: #{tpu_custom_call.1} parent=1 // loop_footer
      %s19 = sadd.s32 1, %s15
    $region7: #{tpu_custom_call.1} parent=1 // loop_footer_branch
      %14 = sbr.rel target = $region3
    $region8: #{tpu_custom_call.1} parent=1 // loop_exit
      _
    %1021 = vsyncpa [#allocation3], 1
    %s1022 = scalar_lea.sflag [#allocation3], 1
    %1023 = vsyncpa %s1022, 1
    %1024 = vsyncpa [#allocation4], 1
    %s1025 = scalar_lea.sflag [#allocation4], 1
    %1026 = vsyncpa %s1025, 1

</llo_original>
